<compile_context>
chip_gen: v5e
topology: v5e:2x2
jax: 0.10.0
libtpu: 0.0.40
codegen_flags: <defaults>
</compile_context>

<pallas_src>
import functools

import jax
import jax.numpy as jnp
from jax.experimental import pallas as pl
from jax.experimental.pallas import tpu as pltpu


def _round_up(x, m):
    return ((x + m - 1) // m) * m


def _pick_tm(n, tm_max=4096):
    # Big tiles amortize the ~0.35us/grid-step overhead; cap so the 1-D
    # "parallel" grid has >= 2 steps when possible (v7x has 2 TensorCores).
    half = -(-n // 2)
    tm = min(tm_max, max(8, _round_up(half, 8)))
    return min(tm, _round_up(n, 8))


# --------------------------------------------------------------------------
# Pallas kernels
# --------------------------------------------------------------------------
def _fused_heads_kernel(u_ref, p_ref, u2_ref,
                        wu_ref, wp_ref, wu2_ref, b_all_ref,
                        w2_ref, b2_ref, o_ref, *, c):
    # u/p/u2: (TM, C) bf16.   wu/wp/wu2: (C, 2C+20) bf16 packed first layers,
    # column layout [up hidden | uu hidden | pc logits].
    # b_all: (1, 2C+20) f32.  w2: (2C, 2) f32 block-diagonal.  b2: (1, 2) f32.
    # o: (TM, 22) f32 lane-packed [user_place, user_user, 20 category probs].
    pre = jnp.dot(u_ref[...], wu_ref[...], preferred_element_type=jnp.float32)
    pre = pre + jnp.dot(p_ref[...], wp_ref[...],
                        preferred_element_type=jnp.float32)
    pre = pre + jnp.dot(u2_ref[...], wu2_ref[...],
                        preferred_element_type=jnp.float32)
    pre = pre + b_all_ref[...]

    hidden = jnp.maximum(pre[:, :2 * c], 0.0)        # (TM, 2C): [up | uu]
    logits = pre[:, 2 * c:]                          # (TM, 20): place-category

    # Both 1-wide second layers as one block-diagonal MXU dot -> (TM, 2).
    y2 = jnp.dot(hidden, w2_ref[...], preferred_element_type=jnp.float32)
    sig = jax.nn.sigmoid(y2 + b2_ref[...])

    m = jnp.max(logits, axis=-1, keepdims=True)      # stable softmax
    e = jnp.exp(logits - m)
    probs = e / jnp.sum(e, axis=-1, keepdims=True)   # exact divide (calibrated)

    o_ref[...] = jnp.concatenate([sig, probs], axis=-1)


def _mlp_head_kernel(xa_ref, xb_ref, w1a_ref, w1b_ref, b1_ref, w2_ref, b2_ref,
                     o_ref):
    # xa/xb: (TM, C) bf16; w1a/w1b: (C, C) bf16; b1/w2: (1, C) f32; b2: (1,1).
    h = jnp.dot(xa_ref[...], w1a_ref[...], preferred_element_type=jnp.float32)
    h = h + jnp.dot(xb_ref[...], w1b_ref[...],
                    preferred_element_type=jnp.float32)
    h = jnp.maximum(h + b1_ref[...], 0.0)
    # 1-wide second layer on VPU (mul) + XLU (lane reduce); MXU kept for the
    # big dots.
    y = jnp.sum(h * w2_ref[...], axis=-1, keepdims=True) + b2_ref[...]
    o_ref[...] = jax.nn.sigmoid(y)


def _category_kernel(x_ref, w_ref, b_ref, o_ref):
    # x: (TM, C) bf16, w: (C, 20) bf16, b: (1, 20) f32, o: (TM, 20) f32.
    logits = jnp.dot(x_ref[...], w_ref[...],
                     preferred_element_type=jnp.float32) + b_ref[...]
    m = jnp.max(logits, axis=-1, keepdims=True)
    e = jnp.exp(logits - m)
    o_ref[...] = e / jnp.sum(e, axis=-1, keepdims=True)


# --------------------------------------------------------------------------
# Wrappers (grid tiles over the row/node dimension; weights are full blocks)
# --------------------------------------------------------------------------
def fused_heads(user_emb, place_emb, user2_emb, params, *, tm_max=4096):
    """All three task heads in one pallas_call sharing the row grid."""
    n, c = user_emb.shape
    k = params["wp"].shape[1] - 2 * c            # 20 categories
    n_out = 2 + k
    tm = _pick_tm(n, tm_max)
    grid = (pl.cdiv(n, tm),)
    emb = pl.BlockSpec((tm, c), lambda i: (i, 0))

    def full(a):
        return pl.BlockSpec(a.shape, lambda i: (0, 0))

    wu, wp, wu2 = params["wu"], params["wp"], params["wu2"]
    b_all, w2, b2 = params["b_all"], params["w2_blk"], params["b2"]

    flops = 2 * n * c * (3 * (2 * c + k) + 4)
    bytes_accessed = (3 * n * c * 2 + n * n_out * 4
                      + (wu.size + wp.size + wu2.size) * 2
                      + (b_all.size + w2.size + b2.size) * 4)

    out = pl.pallas_call(
        functools.partial(_fused_heads_kernel, c=c),
        out_shape=jax.ShapeDtypeStruct((n, n_out), jnp.float32),
        grid=grid,
        in_specs=[emb, emb, emb,
                  full(wu), full(wp), full(wu2),
                  full(b_all), full(w2), full(b2)],
        out_specs=pl.BlockSpec((tm, n_out), lambda i: (i, 0)),
        compiler_params=pltpu.CompilerParams(
            dimension_semantics=("parallel",)),
        cost_estimate=pl.CostEstimate(flops=flops,
                                      transcendentals=n * (k + 2),
                                      bytes_accessed=bytes_accessed),
    )(user_emb.astype(jnp.bfloat16), place_emb.astype(jnp.bfloat16),
      user2_emb.astype(jnp.bfloat16), wu, wp, wu2, b_all, w2, b2)
    return out[:, 0:1], out[:, 1:2], out[:, 2:]


def mlp_head_sigmoid(xa, xb, w1a, w1b, b1, w2_row, b2, *, tm_max=4096):
    n, c = xa.shape
    tm = _pick_tm(n, tm_max)
    grid = (pl.cdiv(n, tm),)
    emb = pl.BlockSpec((tm, c), lambda i: (i, 0))

    def full(a):
        return pl.BlockSpec(a.shape, lambda i: (0, 0))

    flops = 2 * n * c * (2 * c + 1)
    bytes_accessed = (2 * n * c * 2 + n * 4 + (w1a.size + w1b.size) * 2
                      + (b1.size + w2_row.size + b2.size) * 4)

    return pl.pallas_call(
        _mlp_head_kernel,
        out_shape=jax.ShapeDtypeStruct((n, 1), jnp.float32),
        grid=grid,
        in_specs=[emb, emb, full(w1a), full(w1b), full(b1), full(w2_row),
                  full(b2)],
        out_specs=pl.BlockSpec((tm, 1), lambda i: (i, 0)),
        compiler_params=pltpu.CompilerParams(
            dimension_semantics=("parallel",)),
        cost_estimate=pl.CostEstimate(flops=flops, transcendentals=n,
                                      bytes_accessed=bytes_accessed),
    )(xa.astype(jnp.bfloat16), xb.astype(jnp.bfloat16), w1a, w1b, b1, w2_row,
      b2)


def linear_softmax(x, w, b, *, tm_max=4096):
    n, c = x.shape
    k = w.shape[1]
    tm = _pick_tm(n, tm_max)
    grid = (pl.cdiv(n, tm),)

    flops = 2 * n * c * k
    bytes_accessed = n * c * 2 + n * k * 4 + w.size * 2 + b.size * 4

    return pl.pallas_call(
        _category_kernel,
        out_shape=jax.ShapeDtypeStruct((n, k), jnp.float32),
        grid=grid,
        in_specs=[pl.BlockSpec((tm, c), lambda i: (i, 0)),
                  pl.BlockSpec((c, k), lambda i: (0, 0)),
                  pl.BlockSpec((1, k), lambda i: (0, 0))],
        out_specs=pl.BlockSpec((tm, k), lambda i: (i, 0)),
        compiler_params=pltpu.CompilerParams(
            dimension_semantics=("parallel",)),
        cost_estimate=pl.CostEstimate(flops=flops, transcendentals=n * k,
                                      bytes_accessed=bytes_accessed),
    )(x.astype(jnp.bfloat16), w, b)


# --------------------------------------------------------------------------
# Module-equivalent wrapper with deterministic parameter init
# --------------------------------------------------------------------------
def _linear_params(key, fan_in, fan_out):
    # PyTorch nn.Linear default: U(-1/sqrt(fan_in), 1/sqrt(fan_in))
    kw, kb = jax.random.split(key)
    bound = 1.0 / float(fan_in) ** 0.5
    w = jax.random.uniform(kw, (fan_in, fan_out), jnp.float32, -bound, bound)
    b = jax.random.uniform(kb, (1, fan_out), jnp.float32, -bound, bound)
    return w, b


class HGTWithPredictorPallas:
    """Pallas counterpart of HGTWithPredictor's task heads."""

    NUM_CATEGORIES = 20

    def __init__(self, out_channels, key):
        c = out_channels
        k = self.NUM_CATEGORIES
        k_up1, k_up2, k_uu1, k_uu2, k_pc = jax.random.split(key, 5)

        # ---- f32 master parameters (torch layout transposed: (in, out)) ----
        w1, b1 = _linear_params(k_up1, 2 * c, c)
        self.up_w1a, self.up_w1b, self.up_b1 = w1[:c], w1[c:], b1
        w2, b2 = _linear_params(k_up2, c, 1)
        self.up_w2, self.up_b2 = w2.T, b2            # (1, C), (1, 1)

        w1, b1 = _linear_params(k_uu1, 2 * c, c)
        self.uu_w1a, self.uu_w1b, self.uu_b1 = w1[:c], w1[c:], b1
        w2, b2 = _linear_params(k_uu2, c, 1)
        self.uu_w2, self.uu_b2 = w2.T, b2

        self.pc_w, self.pc_b = _linear_params(k_pc, c, k)

        # ---- kernel-side bf16 matmul weights (standalone heads) ----
        bf = jnp.bfloat16
        self.up_w1a_bf = self.up_w1a.astype(bf)
        self.up_w1b_bf = self.up_w1b.astype(bf)
        self.uu_w1a_bf = self.uu_w1a.astype(bf)
        self.uu_w1b_bf = self.uu_w1b.astype(bf)
        self.pc_w_bf = self.pc_w.astype(bf)

        # ---- packed weights for the fused predict_all kernel ----
        # Fused first-layer column layout: [up hidden | uu hidden | pc logits]
        def packed(a_up, a_uu, a_pc):
            cols = [
                a_up if a_up is not None else jnp.zeros((c, c), jnp.float32),
                a_uu if a_uu is not None else jnp.zeros((c, c), jnp.float32),
                a_pc if a_pc is not None else jnp.zeros((c, k), jnp.float32),
            ]
            return jnp.concatenate(cols, axis=1).astype(bf)

        self.wu = packed(self.up_w1a, self.uu_w1a, None)    # user embedding
        self.wp = packed(self.up_w1b, None, self.pc_w)      # place embedding
        self.wu2 = packed(None, self.uu_w1b, None)          # user2 embedding
        self.b_all = jnp.concatenate([self.up_b1, self.uu_b1, self.pc_b],
                                     axis=1)                # (1, 2C+20) f32
        # Block-diagonal second layer: col 0 <- user_place, col 1 <- user_user.
        w2_blk = jnp.zeros((2 * c, 2), jnp.float32)
        w2_blk = w2_blk.at[:c, 0].set(self.up_w2[0])
        w2_blk = w2_blk.at[c:, 1].set(self.uu_w2[0])
        self.w2_blk = w2_blk
        self.b2_pair = jnp.concatenate([self.up_b2, self.uu_b2], axis=1)

    def _fused_params(self):
        return dict(wu=self.wu, wp=self.wp, wu2=self.wu2, b_all=self.b_all,
                    w2_blk=self.w2_blk, b2=self.b2_pair)

    def forward(self, embeddings):
        # TODO(synk): forward() only delegates to the external hgt_model
        # (heterogeneous message passing over x_dict/edge_index_dict), which
        # is not defined in this module; embeddings pass through unchanged.
        return embeddings

    def predict_user_place(self, user_emb, place_emb):
        return mlp_head_sigmoid(user_emb, place_emb, self.up_w1a_bf,
                                self.up_w1b_bf, self.up_b1, self.up_w2,
                                self.up_b2)

    def predict_user_user(self, user1_emb, user2_emb):
        return mlp_head_sigmoid(user1_emb, user2_emb, self.uu_w1a_bf,
                                self.uu_w1b_bf, self.uu_b1, self.uu_w2,
                                self.uu_b2)

    def predict_place_category(self, place_emb):
        return linear_softmax(place_emb, self.pc_w_bf, self.pc_b)

    def predict_all(self, user_emb, place_emb, user2_emb):
        """Fused single-launch version of the three heads (preferred path)."""
        return fused_heads(user_emb, place_emb, user2_emb,
                           self._fused_params())


# --------------------------------------------------------------------------
# Pure-JAX references (for correctness check)
# --------------------------------------------------------------------------
def _ref_mlp_head(xa, xb, w1a, w1b, b1, w2_row, b2):
    h = jnp.maximum(xa @ w1a + xb @ w1b + b1, 0.0)
    return jax.nn.sigmoid(h @ w2_row.T + b2)


def _ref_category(x, w, b):
    return jax.nn.softmax(x @ w + b, axis=1)


def _check(model, user_emb, place_emb, user2_emb):
    # Fused launch (preferred) + standalone per-head launches (API parity).
    up_f, uu_f, pc_f = model.predict_all(user_emb, place_emb, user2_emb)
    up = model.predict_user_place(user_emb, place_emb)
    uu = model.predict_user_user(user_emb, user2_emb)
    pc = model.predict_place_category(place_emb)
    jax.block_until_ready((up_f, uu_f, pc_f, up, uu, pc))

    up_ref = _ref_mlp_head(user_emb, place_emb, model.up_w1a, model.up_w1b,
                           model.up_b1, model.up_w2, model.up_b2)
    uu_ref = _ref_mlp_head(user_emb, user2_emb, model.uu_w1a, model.uu_w1b,
                           model.uu_b1, model.uu_w2, model.uu_b2)
    pc_ref = _ref_category(place_emb, model.pc_w, model.pc_b)

    n = user_emb.shape[0]
    assert up.shape == (n, 1) and uu.shape == (n, 1)
    assert pc.shape == (n, model.NUM_CATEGORIES)
    # bf16 inputs/weights -> loose absolute tolerance vs. the f32 reference.
    for got in (up, up_f):
        assert jnp.allclose(got, up_ref, atol=1e-2)
    for got in (uu, uu_f):
        assert jnp.allclose(got, uu_ref, atol=1e-2)
    for got in (pc, pc_f):
        assert jnp.allclose(got, pc_ref, atol=1e-2)
        assert jnp.allclose(jnp.sum(got, axis=1), 1.0, atol=1e-5)


if __name__ == "__main__":
    C = 32           # hgt_model.out_channels

    key = jax.random.PRNGKey(0)
    k_model, k_u, k_p, k_u2 = jax.random.split(key, 4)
    model = HGTWithPredictorPallas(C, k_model)

    # Small toy case (single grid step, tile clamped to 8 rows).
    N = 8
    user_emb = jax.random.normal(k_u, (N, C), jnp.float32)
    place_emb = jax.random.normal(k_p, (N, C), jnp.float32)
    user2_emb = jax.random.normal(k_u2, (N, C), jnp.float32)
    _check(model, user_emb, place_emb, user2_emb)

    # Multi-step grid (>= 2 steps, v7x cap) with a partial last block.
    N2 = 500
    user_emb2 = jax.random.normal(k_u, (N2, C), jnp.float32)
    place_emb2 = jax.random.normal(k_p, (N2, C), jnp.float32)
    user2_emb2 = jax.random.normal(k_u2, (N2, C), jnp.float32)
    _check(model, user_emb2, place_emb2, user2_emb2)

    print("KERNEL_OK")
</pallas_src>

<mosaic_0001>
module attributes {stable_mosaic.version = 11 : i64} {
  func.func @_fused_heads_kernel(%arg0: i32, %arg1: memref<8x32xbf16, #tpu.memory_space<vmem>>, %arg2: memref<8x32xbf16, #tpu.memory_space<vmem>>, %arg3: memref<8x32xbf16, #tpu.memory_space<vmem>>, %arg4: memref<32x84xbf16, #tpu.memory_space<vmem>>, %arg5: memref<32x84xbf16, #tpu.memory_space<vmem>>, %arg6: memref<32x84xbf16, #tpu.memory_space<vmem>>, %arg7: memref<1x84xf32, #tpu.memory_space<vmem>>, %arg8: memref<64x2xf32, #tpu.memory_space<vmem>>, %arg9: memref<1x2xf32, #tpu.memory_space<vmem>>, %arg10: memref<8x22xf32, #tpu.memory_space<vmem>>) attributes {dimension_semantics = [#tpu.dimension_semantics<parallel>], iteration_bounds = array<i64: 1>, scalar_prefetch = 0 : i64, scratch_operands = 0 : i64, tpu.core_type = #tpu.core_type<tc>, window_params = [{transform_indices = @transform_0, window_bounds = array<i64: 8, 32>}, {transform_indices = @transform_1, window_bounds = array<i64: 8, 32>}, {transform_indices = @transform_2, window_bounds = array<i64: 8, 32>}, {pipeline_mode = #tpu.pipeline_mode<synchronous>, transform_indices = @transform_3, window_bounds = array<i64: 32, 84>}, {pipeline_mode = #tpu.pipeline_mode<synchronous>, transform_indices = @transform_4, window_bounds = array<i64: 32, 84>}, {pipeline_mode = #tpu.pipeline_mode<synchronous>, transform_indices = @transform_5, window_bounds = array<i64: 32, 84>}, {pipeline_mode = #tpu.pipeline_mode<synchronous>, transform_indices = @transform_6, window_bounds = array<i64: 1, 84>}, {pipeline_mode = #tpu.pipeline_mode<synchronous>, transform_indices = @transform_7, window_bounds = array<i64: 64, 2>}, {pipeline_mode = #tpu.pipeline_mode<synchronous>, transform_indices = @transform_8, window_bounds = array<i64: 1, 2>}, {transform_indices = @transform_9, window_bounds = array<i64: 8, 22>}]} {
    %c0 = arith.constant 0 : index
    %c0_0 = arith.constant 0 : index
    %0 = vector.load %arg1[%c0, %c0_0] : memref<8x32xbf16, #tpu.memory_space<vmem>>, vector<8x32xbf16>
    %c0_1 = arith.constant 0 : index
    %c0_2 = arith.constant 0 : index
    %1 = vector.load %arg4[%c0_1, %c0_2] : memref<32x84xbf16, #tpu.memory_space<vmem>>, vector<32x84xbf16>
    %cst = arith.constant dense<0.000000e+00> : vector<8x84xf32>
    %2 = tpu.matmul %0, %1, %cst {dimension_numbers = #tpu.dot_dimension_numbers<[1], [0], [0], [1], [0, 0, 1, 1], [], []>} : vector<8x32xbf16>, vector<32x84xbf16>, vector<8x84xf32> -> vector<8x84xf32>
    %c0_3 = arith.constant 0 : index
    %c0_4 = arith.constant 0 : index
    %3 = vector.load %arg2[%c0_3, %c0_4] : memref<8x32xbf16, #tpu.memory_space<vmem>>, vector<8x32xbf16>
    %c0_5 = arith.constant 0 : index
    %c0_6 = arith.constant 0 : index
    %4 = vector.load %arg5[%c0_5, %c0_6] : memref<32x84xbf16, #tpu.memory_space<vmem>>, vector<32x84xbf16>
    %cst_7 = arith.constant dense<0.000000e+00> : vector<8x84xf32>
    %5 = tpu.matmul %3, %4, %cst_7 {dimension_numbers = #tpu.dot_dimension_numbers<[1], [0], [0], [1], [0, 0, 1, 1], [], []>} : vector<8x32xbf16>, vector<32x84xbf16>, vector<8x84xf32> -> vector<8x84xf32>
    %6 = arith.addf %2, %5 : vector<8x84xf32>
    %c0_8 = arith.constant 0 : index
    %c0_9 = arith.constant 0 : index
    %7 = vector.load %arg3[%c0_8, %c0_9] : memref<8x32xbf16, #tpu.memory_space<vmem>>, vector<8x32xbf16>
    %c0_10 = arith.constant 0 : index
    %c0_11 = arith.constant 0 : index
    %8 = vector.load %arg6[%c0_10, %c0_11] : memref<32x84xbf16, #tpu.memory_space<vmem>>, vector<32x84xbf16>
    %cst_12 = arith.constant dense<0.000000e+00> : vector<8x84xf32>
    %9 = tpu.matmul %7, %8, %cst_12 {dimension_numbers = #tpu.dot_dimension_numbers<[1], [0], [0], [1], [0, 0, 1, 1], [], []>} : vector<8x32xbf16>, vector<32x84xbf16>, vector<8x84xf32> -> vector<8x84xf32>
    %10 = arith.addf %6, %9 : vector<8x84xf32>
    %c0_13 = arith.constant 0 : index
    %c0_14 = arith.constant 0 : index
    %11 = vector.load %arg7[%c0_13, %c0_14] : memref<1x84xf32, #tpu.memory_space<vmem>>, vector<1x84xf32>
    %12 = vector.broadcast %11 : vector<1x84xf32> to vector<8x84xf32>
    %13 = arith.addf %10, %12 : vector<8x84xf32>
    %14 = vector.extract_strided_slice %13 {offsets = [0, 0], sizes = [8, 64], strides = [1, 1]} : vector<8x84xf32> to vector<8x64xf32>
    %cst_15 = arith.constant 0.000000e+00 : f32
    %15 = vector.broadcast %cst_15 : f32 to vector<8x64xf32>
    %16 = arith.maximumf %14, %15 : vector<8x64xf32>
    %17 = vector.extract_strided_slice %13 {offsets = [0, 64], sizes = [8, 20], strides = [1, 1]} : vector<8x84xf32> to vector<8x20xf32>
    %c0_16 = arith.constant 0 : index
    %c0_17 = arith.constant 0 : index
    %18 = vector.load %arg8[%c0_16, %c0_17] : memref<64x2xf32, #tpu.memory_space<vmem>>, vector<64x2xf32>
    %cst_18 = arith.constant dense<0.000000e+00> : vector<8x2xf32>
    %19 = tpu.matmul %16, %18, %cst_18 {dimension_numbers = #tpu.dot_dimension_numbers<[1], [0], [0], [1], [0, 0, 1, 1], [], []>} : vector<8x64xf32>, vector<64x2xf32>, vector<8x2xf32> -> vector<8x2xf32>
    %c0_19 = arith.constant 0 : index
    %c0_20 = arith.constant 0 : index
    %20 = vector.load %arg9[%c0_19, %c0_20] : memref<1x2xf32, #tpu.memory_space<vmem>>, vector<1x2xf32>
    %21 = vector.broadcast %20 : vector<1x2xf32> to vector<8x2xf32>
    %22 = arith.addf %19, %21 : vector<8x2xf32>
    %23 = arith.negf %22 : vector<8x2xf32>
    %24 = math.exp %23 : vector<8x2xf32>
    %cst_21 = arith.constant 1.000000e+00 : f32
    %25 = vector.broadcast %cst_21 : f32 to vector<8x2xf32>
    %26 = arith.addf %25, %24 : vector<8x2xf32>
    %27 = arith.divf %25, %26 : vector<8x2xf32>
    %cst_22 = arith.constant dense<0xFF800000> : vector<8xf32>
    %28 = vector.multi_reduction <maximumf>, %17, %cst_22 [1] : vector<8x20xf32> to vector<8xf32>
    %29 = vector.shape_cast %28 : vector<8xf32> to vector<8x1xf32>
    %30 = vector.broadcast %29 : vector<8x1xf32> to vector<8x20xf32>
    %31 = arith.subf %17, %30 : vector<8x20xf32>
    %32 = math.exp %31 : vector<8x20xf32>
    %cst_23 = arith.constant dense<0.000000e+00> : vector<8xf32>
    %33 = vector.multi_reduction <add>, %32, %cst_23 [1] : vector<8x20xf32> to vector<8xf32>
    %34 = vector.shape_cast %33 : vector<8xf32> to vector<8x1xf32>
    %35 = vector.broadcast %34 : vector<8x1xf32> to vector<8x20xf32>
    %36 = arith.divf %32, %35 : vector<8x20xf32>
    %37 = tpu.concatenate %27, %36 in 1 : vector<8x2xf32>, vector<8x20xf32> -> vector<8x22xf32>
    %c0_24 = arith.constant 0 : index
    %c0_25 = arith.constant 0 : index
    %38 = vector.load %arg10[%c0_24, %c0_25] : memref<8x22xf32, #tpu.memory_space<vmem>>, vector<8x22xf32>
    tpu.vector_store %arg10[%c0_24, %c0_25], %37 {strides = array<i32>} : memref<8x22xf32, #tpu.memory_space<vmem>>, vector<8x22xf32>,
    return
  }
  func.func @transform_0(%arg0: i32) -> (i32, i32) {
    %c0_i32 = arith.constant 0 : i32
    %c0_i32_0 = arith.constant 0 : i32
    return %arg0, %c0_i32 : i32, i32
  }
  func.func @transform_1(%arg0: i32) -> (i32, i32) {
    %c0_i32 = arith.constant 0 : i32
    %c0_i32_0 = arith.constant 0 : i32
    return %arg0, %c0_i32 : i32, i32
  }
  func.func @transform_2(%arg0: i32) -> (i32, i32) {
    %c0_i32 = arith.constant 0 : i32
    %c0_i32_0 = arith.constant 0 : i32
    return %arg0, %c0_i32 : i32, i32
  }
  func.func @transform_3(%arg0: i32) -> (i32, i32) {
    %c0_i32 = arith.constant 0 : i32
    %c0_i32_0 = arith.constant 0 : i32
    %c0_i32_1 = arith.constant 0 : i32
    return %c0_i32, %c0_i32_0 : i32, i32
  }
  func.func @transform_4(%arg0: i32) -> (i32, i32) {
    %c0_i32 = arith.constant 0 : i32
    %c0_i32_0 = arith.constant 0 : i32
    %c0_i32_1 = arith.constant 0 : i32
    return %c0_i32, %c0_i32_0 : i32, i32
  }
  func.func @transform_5(%arg0: i32) -> (i32, i32) {
    %c0_i32 = arith.constant 0 : i32
    %c0_i32_0 = arith.constant 0 : i32
    %c0_i32_1 = arith.constant 0 : i32
    return %c0_i32, %c0_i32_0 : i32, i32
  }
  func.func @transform_6(%arg0: i32) -> (i32, i32) {
    %c0_i32 = arith.constant 0 : i32
    %c0_i32_0 = arith.constant 0 : i32
    %c0_i32_1 = arith.constant 0 : i32
    return %c0_i32, %c0_i32_0 : i32, i32
  }
  func.func @transform_7(%arg0: i32) -> (i32, i32) {
    %c0_i32 = arith.constant 0 : i32
    %c0_i32_0 = arith.constant 0 : i32
    %c0_i32_1 = arith.constant 0 : i32
    return %c0_i32, %c0_i32_0 : i32, i32
  }
  func.func @transform_8(%arg0: i32) -> (i32, i32) {
    %c0_i32 = arith.constant 0 : i32
    %c0_i32_0 = arith.constant 0 : i32
    %c0_i32_1 = arith.constant 0 : i32
    return %c0_i32, %c0_i32_0 : i32, i32
  }
  func.func @transform_9(%arg0: i32) -> (i32, i32) {
    %c0_i32 = arith.constant 0 : i32
    %c0_i32_0 = arith.constant 0 : i32
    return %arg0, %c0_i32 : i32, i32
  }
}

</mosaic_0001>

<llo_original>
// kernel: tpu_custom_call.1
$region0: #{tpu_custom_call.1}
  #allocation0 [shape = 'u32[]', space=smem, size = 0x4, offset = 0x4, fixed_abs, tag = 'smem constant byte address 0x4 - core index']
  #allocation1 [shape = 'u32[72,128]{1,0:T(1,128)}', space=vmem, size = 0x9000, scoped, tag = 'internal scratch']
  %s0 = inlined_call_operand.vmem [shape: bf16[8,32], index: 0, kind: input, shape index: {}]
  %s1 = inlined_call_operand.vmem [shape: bf16[8,32], index: 1, kind: input, shape index: {}]
  %s2 = inlined_call_operand.vmem [shape: bf16[8,32], index: 2, kind: input, shape index: {}]
  %s3 = inlined_call_operand.vmem [shape: bf16[32,84], index: 3, kind: input, shape index: {}]
  %s4 = inlined_call_operand.vmem [shape: bf16[32,84], index: 4, kind: input, shape index: {}]
  %s5 = inlined_call_operand.vmem [shape: bf16[32,84], index: 5, kind: input, shape index: {}]
  %s6 = inlined_call_operand.vmem [shape: f32[1,84], index: 6, kind: input, shape index: {}]
  %s7 = inlined_call_operand.vmem [shape: f32[64,2], index: 7, kind: input, shape index: {}]
  %s8 = inlined_call_operand.vmem [shape: f32[1,2], index: 8, kind: input, shape index: {}]
  %s9 = inlined_call_operand.hbm [shape: f32[8,22], index: 9, kind: output, shape index: {}]
  %s10 = sld [smem:[#allocation0]]
  $region46: #{tpu_custom_call.1} parent=0
    _
  %s12 = ssub.s32 1, %s10
  %s13 = scalar_select 0, %s12, %s10
  $region1: #{tpu_custom_call.1} parent=0
    #allocation2 [shape = 'u8[4096]{0}', space=vmem, size = 0x1000, scoped, tag = 'output window, operand 0, single buffered']
    #allocation3 [shape = 's32[1]{0}', space=sflag, size = 0x4, scoped, tag = 'scoped memory for tpu_custom_call.1']
    %14 = vsyncpa [#allocation3], 0
    // Predicated region
    $region2: #{tpu_custom_call.1} parent=1 // pred_check
      _
    $region3: #{tpu_custom_call.1} parent=1 // pred_check_branch
      %16 = sbr.rel (0) target = $region5
    $region4: #{tpu_custom_call.1} parent=1 // pred_region
      _
    $region5: #{tpu_custom_call.1} parent=1 // pred_fallthru
      _
    // Predicated region
    $region6: #{tpu_custom_call.1} parent=1 // pred_check
      _
    $region7: #{tpu_custom_call.1} parent=1 // pred_check_branch
      %18 = sbr.rel (0) target = $region9
    $region8: #{tpu_custom_call.1} parent=1 // pred_region
      _
    $region9: #{tpu_custom_call.1} parent=1 // pred_fallthru
      _
    // Predicated region
    $region10: #{tpu_custom_call.1} parent=1 // pred_check
      _
    $region11: #{tpu_custom_call.1} parent=1 // pred_check_branch
      %20 = sbr.rel (0) target = $region13
    $region12: #{tpu_custom_call.1} parent=1 // pred_region
      _
    $region13: #{tpu_custom_call.1} parent=1 // pred_fallthru
      _
    // Predicated region
    $region14: #{tpu_custom_call.1} parent=1 // pred_check
      _
    $region15: #{tpu_custom_call.1} parent=1 // pred_check_branch
      %22 = sbr.rel (0) target = $region17
    $region16: #{tpu_custom_call.1} parent=1 // pred_region
      _
    $region17: #{tpu_custom_call.1} parent=1 // pred_fallthru
      _
    // Predicated region
    $region18: #{tpu_custom_call.1} parent=1 // pred_check
      _
    $region19: #{tpu_custom_call.1} parent=1 // pred_check_branch
      %24 = sbr.rel (0) target = $region21
    $region20: #{tpu_custom_call.1} parent=1 // pred_region
      _
    $region21: #{tpu_custom_call.1} parent=1 // pred_fallthru
      _
    // Predicated region
    $region22: #{tpu_custom_call.1} parent=1 // pred_check
      _
    $region23: #{tpu_custom_call.1} parent=1 // pred_check_branch
      %26 = sbr.rel (0) target = $region25
    $region24: #{tpu_custom_call.1} parent=1 // pred_region
      _
    $region25: #{tpu_custom_call.1} parent=1 // pred_fallthru
      _
    // Predicated region
    $region26: #{tpu_custom_call.1} parent=1 // pred_check
      _
    $region27: #{tpu_custom_call.1} parent=1 // pred_check_branch
      %28 = sbr.rel (0) target = $region29
    $region28: #{tpu_custom_call.1} parent=1 // pred_region
      _
    $region29: #{tpu_custom_call.1} parent=1 // pred_fallthru
      _
    // Predicated region
    $region30: #{tpu_custom_call.1} parent=1 // pred_check
      _
    $region31: #{tpu_custom_call.1} parent=1 // pred_check_branch
      %30 = sbr.rel (0) target = $region33
    $region32: #{tpu_custom_call.1} parent=1 // pred_region
      _
    $region33: #{tpu_custom_call.1} parent=1 // pred_fallthru
      _
    // Predicated region
    $region34: #{tpu_custom_call.1} parent=1 // pred_check
      _
    $region35: #{tpu_custom_call.1} parent=1 // pred_check_branch
      %32 = sbr.rel (0) target = $region37
    $region36: #{tpu_custom_call.1} parent=1 // pred_region
      _
    $region37: #{tpu_custom_call.1} parent=1 // pred_fallthru
      _
    %v34 = vld [vmem:[%s0] sm:$0xf]
    %v35 = vld [vmem:[%s3] sm:$0xf]
    %v36 = vld [vmem:[%s3 + $0x4] sm:$0xf]
    %v37 = vld [vmem:[%s3 + $0x8] sm:$0xf]
    %v38 = vld [vmem:[%s3 + $0xc] sm:$0xf]
    %v39 = vld [vmem:[%s1] sm:$0xf]
    %v40 = vld [vmem:[%s4] sm:$0xf]
    %v41 = vld [vmem:[%s4 + $0x4] sm:$0xf]
    %v42 = vld [vmem:[%s4 + $0x8] sm:$0xf]
    %v43 = vld [vmem:[%s4 + $0xc] sm:$0xf]
    %v48 = vunpack.c.l.b16 %v40
    %v49 = vunpack.c.l.b16 %v41
    %v50 = vunpack.c.l.b16 %v42
    %v51 = vunpack.c.l.b16 %v43
    %v52 = vpack.c.b16 %v49, %v48
    %v53 = vpack.c.b16 %v51, %v50
    %vm56 = vcmask 261120
    %v58 = vsel %vm56, %v39, 0
    %60 = vmatpush.bf16.msra.mxu0 0
    %61 = vmatpush.bf16.msra.mxu0 0
    %62 = vmatpush.bf16.msra.mxu0 0
    %63 = vmatpush.bf16.msra.mxu0 0
    %64 = vmatpush.bf16.msra.mxu0 0
    %65 = vmatpush.bf16.msra.mxu0 0
    %66 = vmatpush.bf16.msra.mxu0 %v53
    %67 = vmatpush.bf16.msra.mxu0 %v52
    %68 = vmatmul.bf16.gmra.mxu0 %v58
    %v69 = vpop.f32.mrf.mxu0
    %v70 = vadd.f32 0.0, %v69
    %v71 = vpop.f32.mrf.mxu0
    %72 = vdwg.mxu0
    %v77 = vunpack.c.l.b16 %v35
    %v78 = vunpack.c.l.b16 %v36
    %v79 = vunpack.c.l.b16 %v37
    %v80 = vunpack.c.l.b16 %v38
    %v81 = vpack.c.b16 %v78, %v77
    %v82 = vpack.c.b16 %v80, %v79
    %v86 = vsel %vm56, %v34, 0
    %88 = vmatpush.bf16.msra.mxu0 0
    %89 = vmatpush.bf16.msra.mxu0 0
    %90 = vmatpush.bf16.msra.mxu0 0
    %91 = vmatpush.bf16.msra.mxu0 0
    %92 = vmatpush.bf16.msra.mxu0 0
    %93 = vmatpush.bf16.msra.mxu0 0
    %94 = vmatpush.bf16.msra.mxu0 %v82
    %95 = vmatpush.bf16.msra.mxu0 %v81
    %96 = vmatmul.bf16.gmra.mxu0 %v86
    %v97 = vpop.f32.mrf.mxu0
    %v98 = vadd.f32 %v70, %v97
    %v99 = vpop.f32.mrf.mxu0
    %100 = vdwg.mxu0
    %v101 = vld [vmem:[%s2] sm:$0xf]
    %v102 = vld [vmem:[%s5] sm:$0xf]
    %v103 = vld [vmem:[%s5 + $0x4] sm:$0xf]
    %v104 = vld [vmem:[%s5 + $0x8] sm:$0xf]
    %v105 = vld [vmem:[%s5 + $0xc] sm:$0xf]
    %v110 = vunpack.c.l.b16 %v102
    %v111 = vunpack.c.l.b16 %v103
    %v112 = vunpack.c.l.b16 %v104
    %v113 = vunpack.c.l.b16 %v105
    %v114 = vpack.c.b16 %v111, %v110
    %v115 = vpack.c.b16 %v113, %v112
    %v119 = vsel %vm56, %v101, 0
    %121 = vmatpush.bf16.msra.mxu0 0
    %122 = vmatpush.bf16.msra.mxu0 0
    %123 = vmatpush.bf16.msra.mxu0 0
    %124 = vmatpush.bf16.msra.mxu0 0
    %125 = vmatpush.bf16.msra.mxu0 0
    %126 = vmatpush.bf16.msra.mxu0 0
    %127 = vmatpush.bf16.msra.mxu0 %v115
    %128 = vmatpush.bf16.msra.mxu0 %v114
    %129 = vmatmul.bf16.gmra.mxu0 %v119
    %v130 = vpop.f32.mrf.mxu0
    %v131 = vadd.f32 0.0, %v130
    %v132 = vpop.f32.mrf.mxu0
    %133 = vdwg.mxu0
    %v134 = vadd.f32 %v98, %v131
    %v135 = vld [vmem:[%s6] sm:$0x1]
    %v137 = vperm.slane %v135, 0
    %v139 = vadd.f32 %v134, %v137
    %v140 = vmax.f32 %v139, 0.0
    %v141 = vld [vmem:[%s7] sm:$0xff]
    %v142 = vld [vmem:[%s7 + $0x8] sm:$0xff]
    %v143 = vld [vmem:[%s7 + $0x10] sm:$0xff]
    %v144 = vld [vmem:[%s7 + $0x18] sm:$0xff]
    %v145 = vld [vmem:[%s7 + $0x20] sm:$0xff]
    %v146 = vld [vmem:[%s7 + $0x28] sm:$0xff]
    %v147 = vld [vmem:[%s7 + $0x30] sm:$0xff]
    %v148 = vld [vmem:[%s7 + $0x38] sm:$0xff]
    %v149 = vld [vmem:[%s8] sm:$0x1]
    %v151 = vperm.slane %v149, 0
    %vm153 = vcmask 523264
    %v155 = vsel %vm153, %v140, 0
    %157 = vmatpush.msra.mxu0 0.0
    %158 = vmatpush.msra.mxu0 0.0
    %159 = vmatpush.msra.mxu0 0.0
    %160 = vmatpush.msra.mxu0 0.0
    %161 = vmatpush.msra.mxu0 0.0
    %162 = vmatpush.msra.mxu0 0.0
    %163 = vmatpush.msra.mxu0 0.0
    %164 = vmatpush.msra.mxu0 0.0
    %165 = vmatpush.msra.mxu0 %v148
    %166 = vmatpush.msra.mxu0 %v147
    %167 = vmatpush.msra.mxu0 %v146
    %168 = vmatpush.msra.mxu0 %v145
    %169 = vmatpush.msra.mxu0 %v144
    %170 = vmatpush.msra.mxu0 %v143
    %171 = vmatpush.msra.mxu0 %v142
    %172 = vmatpush.msra.mxu0 %v141
    %173 = vmatmul.f32.gmra.mxu0 %v155
    %v174 = vpop.f32.mrf.mxu0
    %v175 = vadd.f32 %v151, %v174
    %176 = vdwg.mxu0
    %v177 = vxor.u32 %v175, 2147483648
    %v178 = vmul.f32 %v177, 1.442695
    %v179 = vpow.pop %v178
    %v180 = vadd.f32 %v179, 1.0
    %v181 = vrcp.pop %v180
    %v182 = vmul.f32 %v180, %v181
    %v183 = vsub.f32 1.0, %v182
    %v184 = vmul.f32 %v181, %v183
    %v185 = vadd.f32 %v181, %v184
    %vm186 = vweird.f32 %v180
    %vm187 = vweird.f32 %v181
    %vm188 = vmor %vm186, %vm187
    %v189 = vsel %vm188, %v181, %v185
    %v190 = vand.u32 2147483647, %v180
    %vm191 = vcmp.eq.f32.partialorder %v190, 8.507059e+37
    %v192 = vand.u32 %v180, 2147483648
    %v193 = vor.u32 1.1754944e-38, %v192
    %v194 = vsel %vm191, %v193, %v189
    %v195 = vmul.f32 1.0, %v194
    %vm196 = vcmask 687616
    %v197 = vsel %vm196, %v139, -inf
    %198 = vmax.xlane.f32.xlu0 %v197
    %v199 = vpop.xlane.xlu0 %198
    %v200 = vsub.f32 %v139, %v199
    %v201 = vmul.f32 %v200, 1.442695
    %v202 = vpow.pop %v201
    %204 = vrot.lane.b32.xlu0 %v202, 64
    %v205 = vpop.permute.xlu0 %204
    %vm207 = vcmask 162816
    %v208 = vsel %vm207, %v205, 0.0
    %209 = vadd.xlane.f32.xlu0 %v208
    %v210 = vpop.xlane.xlu0 %209
    %v211 = vrcp.pop %v210
    %v212 = vmul.f32 %v210, %v211
    %v213 = vsub.f32 1.0, %v212
    %v214 = vmul.f32 %v211, %v213
    %v215 = vadd.f32 %v211, %v214
    %vm216 = vweird.f32 %v210
    %vm217 = vweird.f32 %v211
    %vm218 = vmor %vm216, %vm217
    %v219 = vsel %vm218, %v211, %v215
    %v220 = vand.u32 2147483647, %v210
    %vm221 = vcmp.eq.f32.partialorder %v220, 8.507059e+37
    %v222 = vand.u32 %v210, 2147483648
    %v223 = vor.u32 1.1754944e-38, %v222
    %v224 = vsel %vm221, %v223, %v219
    %v225 = vmul.f32 %v202, %v224
    %227 = vrot.lane.b32.xlu0 %v225, 66
    %v228 = vpop.permute.xlu0 %227
    %vm230 = vcmask 15360
    %v231 = vsel %vm230, %v195, %v228
    %vm232 = vcmask 179200
    %233 = vst.msk [vmem:[#allocation2] sm:$0xff] %vm232, %v231
    // Predicated region
    $region38: #{tpu_custom_call.1} parent=1 // pred_check
      _
    $region39: #{tpu_custom_call.1} parent=1 // pred_check_branch
      %235 = sbr.rel (0) target = $region41
    $region40: #{tpu_custom_call.1} parent=1 // pred_region
      %237 = vsyncadd [#allocation3], 0
      %s239 = sshll.u32 [#allocation2], 4
      %s240 = int_to_ptr.vmem [resolvable:$true] %s239
      %s241 = sshll.u32 %s9, 4
      %s242 = int_to_ptr.hbm [resolvable:$true] %s241
      %244 = dma.vmem_to_hbm [thread:$0]  %s240, 128, %s242, [#allocation3]
    $region41: #{tpu_custom_call.1} parent=1 // pred_fallthru
      _
    // Predicated region
    $region42: #{tpu_custom_call.1} parent=1 // pred_check
      _
    $region43: #{tpu_custom_call.1} parent=1 // pred_check_branch
      %246 = sbr.rel (0) target = $region45
    $region44: #{tpu_custom_call.1} parent=1 // pred_region
      %248 = dma.done [#allocation3], 128
    $region45: #{tpu_custom_call.1} parent=1 // pred_fallthru
      _
    %249 = vsyncpa [#allocation3], 1

</llo_original>
